<compile_context>
chip_gen: v7x
topology: tpu7x:2x2x1
jax: 0.10.0
libtpu: 0.0.40
codegen_flags: <defaults>
</compile_context>

<pallas_src>
import jax
import jax.numpy as jnp
from jax.experimental import pallas as pl
from jax.experimental.pallas import tpu as pltpu


def _round_up(x, m):
    return ((x + m - 1) // m) * m


def _cdiv(a, b):
    return -(-a // b)


def mask_cross_atten_kernel(tgt_ref, src_ref, wctx_ref, attn_ref):
    tgt = tgt_ref[...]                              # (Bb, idf, tq)       mxu dtype
    src = src_ref[...]                              # (Bb, idf, sourceL)  mxu dtype

    # Tiny transpose of the smallest tensor only (idf x sourceL), so both matmuls
    # are in standard (contract lhs-last with rhs-second-to-last) orientation.
    src_t = jnp.swapaxes(src, 1, 2)                 # (Bb, sourceL, idf)

    # Attention logits directly in transposed layout: (Bb, sourceL, tq).
    # queryL (tq) stays in the lane dimension; no (queryL, sourceL=8) lane-waste tile.
    logits = jnp.einsum('bsd,bdq->bsq', src_t, tgt,
                        preferred_element_type=jnp.float32)

    # Softmax over sourceL (axis=1): cheap sublane reduction, f32 math.
    m = jnp.max(logits, axis=1, keepdims=True)
    e = jnp.exp(logits - m)
    denom = jnp.sum(e, axis=1, keepdims=True)
    p = e * pl.reciprocal(denom, approx=True)       # (Bb, sourceL, tq), f32

    # weightedContext = sourceT @ attn^T, already in (Bb, idf, tq) layout.
    wctx = jnp.einsum('bds,bsq->bdq', src, p.astype(src.dtype),
                      preferred_element_type=jnp.float32)

    wctx_ref[...] = wctx.astype(wctx_ref.dtype)
    attn_ref[...] = p.astype(attn_ref.dtype)


def mask_cross_atten(inp, context, w_conv, *, mxu_dtype=jnp.bfloat16):
    """inp: (B, idf, ih, iw), context: (B, cdf, sourceL), w_conv: (idf, cdf)."""
    B, idf, ih, iw = inp.shape
    Bc, cdf, sourceL = context.shape
    assert Bc == B
    queryL = ih * iw
    out_dtype = inp.dtype

    # 1x1 conv hoisted out of the grid: one batched (idf,cdf)x(cdf,B*sourceL) matmul.
    sourceT = jnp.einsum('dc,bcs->bds', w_conv.astype(jnp.float32),
                         context.astype(jnp.float32)).astype(mxu_dtype)   # (B, idf, sL)

    # Cast the dominant query stream once in the wrapper (halves its DMA bytes).
    target = inp.reshape(B, idf, queryL).astype(mxu_dtype)

    in_itemsize = jnp.dtype(mxu_dtype).itemsize
    out_itemsize = jnp.dtype(out_dtype).itemsize

    # Lane-dense queryL: pad to a multiple of 128, then pick a queryL tile (<=1024).
    q_pad = _round_up(queryL, 128)
    tq = 128
    for mult in (8, 4, 2):
        if (q_pad // 128) % mult == 0:
            tq = 128 * mult
            break
    n_q_tiles = q_pad // tq

    # Fold batches per grid step to amortize per-step overhead, but keep >= 2 grid
    # steps (v7x has 2 TensorCores) and stay within a ~32 MiB double-buffered budget.
    Bb = min(B, 8)
    while Bb > 1 and _cdiv(B, Bb) * n_q_tiles < 2:
        Bb //= 2

    def blk_bytes(bb, tq_):
        in_b = (bb * idf * tq_ + bb * idf * sourceL) * in_itemsize
        out_b = (bb * idf * tq_ + bb * sourceL * tq_) * out_itemsize
        return (in_b + out_b) * 2  # double-buffered

    while Bb > 1 and blk_bytes(Bb, tq) > 32 * 2 ** 20:
        Bb //= 2
    while tq > 128 and blk_bytes(Bb, tq) > 32 * 2 ** 20:
        tq //= 2
    n_q_tiles = q_pad // tq
    B_pad = _round_up(B, Bb)

    if q_pad != queryL:
        target = jnp.pad(target, ((0, 0), (0, 0), (0, q_pad - queryL)))
    if B_pad != B:
        target = jnp.pad(target, ((0, B_pad - B), (0, 0), (0, 0)))
        sourceT = jnp.pad(sourceT, ((0, B_pad - B), (0, 0), (0, 0)))

    vmem_limit = int(min(64 * 2 ** 20, max(32 * 2 ** 20, 4 * blk_bytes(Bb, tq))))

    wctx_p, attn_p = pl.pallas_call(
        mask_cross_atten_kernel,
        out_shape=(
            jax.ShapeDtypeStruct((B_pad, idf, q_pad), out_dtype),
            jax.ShapeDtypeStruct((B_pad, sourceL, q_pad), out_dtype),
        ),
        grid_spec=pltpu.PrefetchScalarGridSpec(
            num_scalar_prefetch=0,
            grid=(B_pad // Bb, n_q_tiles),
            in_specs=[
                pl.BlockSpec((Bb, idf, tq), lambda b, q: (b, 0, q)),
                pl.BlockSpec((Bb, idf, sourceL), lambda b, q: (b, 0, 0)),
            ],
            out_specs=[
                pl.BlockSpec((Bb, idf, tq), lambda b, q: (b, 0, q)),
                pl.BlockSpec((Bb, sourceL, tq), lambda b, q: (b, 0, q)),
            ],
        ),
        compiler_params=pltpu.CompilerParams(
            dimension_semantics=("parallel", "parallel"),
            vmem_limit_bytes=vmem_limit,
        ),
    )(target, sourceT)

    wctx = wctx_p[:B, :, :queryL]                                      # (B, idf, queryL)
    attn = attn_p[:B, :, :queryL].reshape(B, sourceL, ih, iw)          # (B, sourceL, ih, iw)
    return wctx, attn


def init_params(key, idf, cdf):
    k1, k2, k3 = jax.random.split(key, 3)
    # Shapes match nn.Conv2d(cdf, out, 1, bias=False) weights, squeezed to 2D.
    w_conv = jax.random.normal(k1, (idf, cdf), jnp.float32) * 0.1    # conv_context
    w_conv2 = jax.random.normal(k2, (256, cdf), jnp.float32) * 0.1   # conv_context2 (unused in forward)
    w_conv3 = jax.random.normal(k3, (160, cdf), jnp.float32) * 0.1   # conv_context3 (unused in forward)
    return w_conv, w_conv2, w_conv3


if __name__ == "__main__":
    B, idf, cdf = 2, 32, 16
    ih = iw = 8
    sourceL = 8

    key = jax.random.PRNGKey(0)
    kx, kc, kp = jax.random.split(key, 3)
    x = jax.random.normal(kx, (B, idf, ih, iw), jnp.float32)
    context = jax.random.normal(kc, (B, cdf, sourceL), jnp.float32)
    w_conv, _, _ = init_params(kp, idf, cdf)

    weighted_context, attn = mask_cross_atten(x, context, w_conv)
    jax.block_until_ready((weighted_context, attn))

    assert weighted_context.shape == (B, idf, ih * iw)
    assert attn.shape == (B, sourceL, ih, iw)
    print("KERNEL_OK")
</pallas_src>

<mosaic_0001>
module attributes {stable_mosaic.version = 11 : i64} {
  func.func @mask_cross_atten_kernel(%arg0: i32, %arg1: i32, %arg2: memref<1x32x128xbf16, #tpu.memory_space<vmem>>, %arg3: memref<1x32x8xbf16, #tpu.memory_space<vmem>>, %arg4: memref<1x32x128xf32, #tpu.memory_space<vmem>>, %arg5: memref<1x8x128xf32, #tpu.memory_space<vmem>>) attributes {dimension_semantics = [#tpu.dimension_semantics<parallel>, #tpu.dimension_semantics<parallel>], iteration_bounds = array<i64: 2, 1>, scalar_prefetch = 0 : i64, scratch_operands = 0 : i64, tpu.core_type = #tpu.core_type<tc>, window_params = [{transform_indices = @transform_0, window_bounds = array<i64: 1, 32, 128>}, {transform_indices = @transform_1, window_bounds = array<i64: 1, 32, 8>}, {transform_indices = @transform_2, window_bounds = array<i64: 1, 32, 128>}, {transform_indices = @transform_3, window_bounds = array<i64: 1, 8, 128>}]} {
    %c0 = arith.constant 0 : index
    %c0_0 = arith.constant 0 : index
    %c0_1 = arith.constant 0 : index
    %0 = vector.load %arg2[%c0, %c0_0, %c0_1] : memref<1x32x128xbf16, #tpu.memory_space<vmem>>, vector<1x32x128xbf16>
    %c0_2 = arith.constant 0 : index
    %c0_3 = arith.constant 0 : index
    %c0_4 = arith.constant 0 : index
    %1 = vector.load %arg3[%c0_2, %c0_3, %c0_4] : memref<1x32x8xbf16, #tpu.memory_space<vmem>>, vector<1x32x8xbf16>
    %2 = tpu.transpose %1, [0, 2, 1] : vector<1x32x8xbf16> -> vector<1x8x32xbf16>
    "tpu.trace_start"() <{level = 10 : i32, message = "bsd,bdq->bsq"}> : () -> ()
    %cst = arith.constant dense<0.000000e+00> : vector<1x8x128xf32>
    %3 = tpu.matmul %2, %0, %cst {dimension_numbers = #tpu.dot_dimension_numbers<[2], [1], [1], [2], [0, 0, 0, 1, 1, 2], [0], [0]>} : vector<1x8x32xbf16>, vector<1x32x128xbf16>, vector<1x8x128xf32> -> vector<1x8x128xf32>
    "tpu.trace_stop"() : () -> ()
    %cst_5 = arith.constant dense<0xFF800000> : vector<1x128xf32>
    %4 = vector.multi_reduction <maximumf>, %3, %cst_5 [1] : vector<1x8x128xf32> to vector<1x128xf32>
    %5 = vector.shape_cast %4 : vector<1x128xf32> to vector<1x1x128xf32>
    %6 = vector.broadcast %5 : vector<1x1x128xf32> to vector<1x8x128xf32>
    %7 = arith.subf %3, %6 : vector<1x8x128xf32>
    %8 = math.exp %7 : vector<1x8x128xf32>
    %cst_6 = arith.constant dense<0.000000e+00> : vector<1x128xf32>
    %9 = vector.multi_reduction <add>, %8, %cst_6 [1] : vector<1x8x128xf32> to vector<1x128xf32>
    %10 = vector.shape_cast %9 : vector<1x128xf32> to vector<1x1x128xf32>
    %11 = tpu.reciprocal %10 {approx = true} : vector<1x1x128xf32> -> vector<1x1x128xf32>
    %12 = vector.broadcast %11 : vector<1x1x128xf32> to vector<1x8x128xf32>
    %13 = arith.mulf %8, %12 : vector<1x8x128xf32>
    %14 = arith.truncf %13 : vector<1x8x128xf32> to vector<1x8x128xbf16>
    "tpu.trace_start"() <{level = 10 : i32, message = "bds,bsq->bdq"}> : () -> ()
    %cst_7 = arith.constant dense<0.000000e+00> : vector<1x32x128xf32>
    %15 = tpu.matmul %1, %14, %cst_7 {dimension_numbers = #tpu.dot_dimension_numbers<[2], [1], [1], [2], [0, 0, 0, 1, 1, 2], [0], [0]>} : vector<1x32x8xbf16>, vector<1x8x128xbf16>, vector<1x32x128xf32> -> vector<1x32x128xf32>
    "tpu.trace_stop"() : () -> ()
    %c0_8 = arith.constant 0 : index
    %c0_9 = arith.constant 0 : index
    %c0_10 = arith.constant 0 : index
    %16 = vector.load %arg4[%c0_8, %c0_9, %c0_10] : memref<1x32x128xf32, #tpu.memory_space<vmem>>, vector<1x32x128xf32>
    tpu.vector_store %arg4[%c0_8, %c0_9, %c0_10], %15 {strides = array<i32>} : memref<1x32x128xf32, #tpu.memory_space<vmem>>, vector<1x32x128xf32>,
    %c0_11 = arith.constant 0 : index
    %c0_12 = arith.constant 0 : index
    %c0_13 = arith.constant 0 : index
    %17 = vector.load %arg5[%c0_11, %c0_12, %c0_13] : memref<1x8x128xf32, #tpu.memory_space<vmem>>, vector<1x8x128xf32>
    tpu.vector_store %arg5[%c0_11, %c0_12, %c0_13], %13 {strides = array<i32>} : memref<1x8x128xf32, #tpu.memory_space<vmem>>, vector<1x8x128xf32>,
    return
  }
  func.func @transform_0(%arg0: i32, %arg1: i32) -> (i32, i32, i32) {
    %c0_i32 = arith.constant 0 : i32
    %c0_i32_0 = arith.constant 0 : i32
    return %arg0, %c0_i32, %arg1 : i32, i32, i32
  }
  func.func @transform_1(%arg0: i32, %arg1: i32) -> (i32, i32, i32) {
    %c0_i32 = arith.constant 0 : i32
    %c0_i32_0 = arith.constant 0 : i32
    %c0_i32_1 = arith.constant 0 : i32
    return %arg0, %c0_i32, %c0_i32_0 : i32, i32, i32
  }
  func.func @transform_2(%arg0: i32, %arg1: i32) -> (i32, i32, i32) {
    %c0_i32 = arith.constant 0 : i32
    %c0_i32_0 = arith.constant 0 : i32
    return %arg0, %c0_i32, %arg1 : i32, i32, i32
  }
  func.func @transform_3(%arg0: i32, %arg1: i32) -> (i32, i32, i32) {
    %c0_i32 = arith.constant 0 : i32
    %c0_i32_0 = arith.constant 0 : i32
    return %arg0, %c0_i32, %arg1 : i32, i32, i32
  }
}

</mosaic_0001>

<llo_original>
// kernel: tpu_custom_call.1
$region0: #{tpu_custom_call.1}
  #allocation0 [shape = 'u32[]', space=smem, size = 0x4, offset = 0x4, fixed_abs, tag = 'smem constant byte address 0x4 - core index']
  #allocation1 [shape = 'u32[144,128]{1,0:T(1,128)}', space=vmem, size = 0x12000, scoped, tag = 'internal scratch']
  %s0 = inlined_call_operand.vmem [shape: bf16[2,32,128], index: 0, kind: input, shape index: {}]
  %s1 = inlined_call_operand.vmem [shape: bf16[2,32,8], index: 1, kind: input, shape index: {}]
  %s2 = inlined_call_operand.hbm [shape: f32[2,32,128], index: 2, kind: output, shape index: {0}]
  %s3 = inlined_call_operand.hbm [shape: f32[2,8,128], index: 3, kind: output, shape index: {1}]
  %4 = xla_tuple %s2, %s3
  %s5 = sld [smem:[#allocation0]]
  $region49: #{tpu_custom_call.1} parent=0
    _
  %s7 = ssub.s32 1, %s5
  %s8 = scalar_select 0, %s7, %s5
  $region1: #{tpu_custom_call.1} parent=0
    #allocation2 [shape = 'u8[32768]{0}', space=vmem, size = 0x8000, scoped, tag = 'output window, operand 0']
    #allocation3 [shape = 's32[2]{0}', space=sflag, size = 0x8, scoped, tag = 'scoped memory for tpu_custom_call.1']
    #allocation4 [shape = 'u8[8192]{0}', space=vmem, size = 0x2000, scoped, tag = 'output window, operand 1']
    #allocation5 [shape = 's32[2]{0}', space=sflag, size = 0x8, scoped, tag = 'scoped memory for tpu_custom_call.1']
    %9 = vsyncpa [#allocation3], 0
    %s10 = scalar_lea.sflag [#allocation3], 1
    %11 = vsyncpa %s10, 0
    %12 = vsyncpa [#allocation5], 0
    %s13 = scalar_lea.sflag [#allocation5], 1
    %14 = vsyncpa %s13, 0
    loop: start=0, step=1, limit=4
    $region2: #{tpu_custom_call.1} parent=1 // loop_pre_header
      _
    $region3: #{tpu_custom_call.1} parent=1 // loop_header
      %s16 = sphi 0, %s20
      %p17 = scmp.ge.s32.totalorder %s16, 4
      %s23 = sphi 0, %s35
      %s24 = sphi 0, %s31
      %s25 = sphi 0, %s23
      %s26 = sphi 0, %s24
      %s27 = sphi 0, %s25
      %s28 = sphi 0, %s26
      %s40 = sphi 0, %s42
      %s43 = sphi 0, %s40
      %s44 = sphi 0, %s43
      %s60 = sphi 0, %s44
      %s66 = sphi 0, %s68
      %s69 = sphi 0, %s66
      %s70 = sphi 0, %s69
      %s86 = sphi 0, %s70
      %s94 = sphi 0, %s96
      %s97 = sphi 0, %s94
      %s98 = sphi 0, %s97
      %s114 = sphi 0, %s98
      %s122 = sphi 0, %s124
      %s125 = sphi 0, %s122
      %s126 = sphi 0, %s125
      %s142 = sphi 0, %s126
    $region4: #{tpu_custom_call.1} parent=1 // loop_header_branch
      %19 = sbr.rel (%p17) target = $region8
    $region5: #{tpu_custom_call.1} parent=1 // loop_body
      %s21 = ssub.s32 %s16, 1
      %s22 = ssub.s32 %s16, 2
      %s29 = sadd.s32 1, %s24
      %p30 = scmp.ge.s32.totalorder %s29, 1
      %s31 = scalar_select %p30, 0, %s29
      %s32 = sadd.s32 1, %s23
      %s33 = scalar_select %p30, %s32, %s23
      %p34 = scmp.ge.s32.totalorder %s33, 2
      %s35 = scalar_select %p34, 0, %s33
      %s36 = ssub.s32 %s23, %s35
      %s37 = ssub.s32 %s24, %s31
      %s38 = sor.u32 %s36, %s37
      %p39 = scmp.eq.s32.totalorder %s38, 0
      %s41 = sadd.s32 %s40, 1
      %s42 = scalar_select %p39, %s40, %s41
      %p45 = pneg %p39
      %p46 = scmp.eq.s32.totalorder %s16, 1
      %p47 = por %p45, %p46
      %p48 = scmp.ne.s32.totalorder %s40, %s43
      %p49 = scmp.eq.s32.totalorder %s16, 0
      %p50 = por %p48, %p49
      %p51 = scmp.ne.s32.totalorder %s40, %s43
      %p52 = scmp.eq.s32.totalorder %s21, 1
      %p53 = por %p51, %p52
      %p54 = scmp.ne.s32.totalorder %s43, %s44
      %p55 = scmp.eq.s32.totalorder %s21, 0
      %p56 = por %p54, %p55
      %p57 = scmp.ne.s32.totalorder %s43, %s44
      %p58 = scmp.eq.s32.totalorder %s22, 1
      %p59 = por %p57, %p58
      %p61 = scmp.ne.s32.totalorder %s44, %s60
      %p62 = scmp.eq.s32.totalorder %s22, 0
      %p63 = por %p61, %p62
      %s64 = ssub.s32 %s23, %s35
      %p65 = scmp.eq.s32.totalorder %s64, 0
      %s67 = sadd.s32 %s66, 1
      %s68 = scalar_select %p65, %s66, %s67
      %p71 = pneg %p65
      %p72 = scmp.eq.s32.totalorder %s16, 1
      %p73 = por %p71, %p72
      %p74 = scmp.ne.s32.totalorder %s66, %s69
      %p75 = scmp.eq.s32.totalorder %s16, 0
      %p76 = por %p74, %p75
      %p77 = scmp.ne.s32.totalorder %s66, %s69
      %p78 = scmp.eq.s32.totalorder %s21, 1
      %p79 = por %p77, %p78
      %p80 = scmp.ne.s32.totalorder %s69, %s70
      %p81 = scmp.eq.s32.totalorder %s21, 0
      %p82 = por %p80, %p81
      %p83 = scmp.ne.s32.totalorder %s69, %s70
      %p84 = scmp.eq.s32.totalorder %s22, 1
      %p85 = por %p83, %p84
      %p87 = scmp.ne.s32.totalorder %s70, %s86
      %p88 = scmp.eq.s32.totalorder %s22, 0
      %p89 = por %p87, %p88
      %s90 = ssub.s32 %s23, %s35
      %s91 = ssub.s32 %s24, %s31
      %s92 = sor.u32 %s90, %s91
      %p93 = scmp.eq.s32.totalorder %s92, 0
      %s95 = sadd.s32 %s94, 1
      %s96 = scalar_select %p93, %s94, %s95
      %p99 = pneg %p93
      %p100 = scmp.eq.s32.totalorder %s16, 1
      %p101 = por %p99, %p100
      %p102 = scmp.ne.s32.totalorder %s94, %s97
      %p103 = scmp.eq.s32.totalorder %s16, 0
      %p104 = por %p102, %p103
      %p105 = scmp.ne.s32.totalorder %s94, %s97
      %p106 = scmp.eq.s32.totalorder %s21, 1
      %p107 = por %p105, %p106
      %p108 = scmp.ne.s32.totalorder %s97, %s98
      %p109 = scmp.eq.s32.totalorder %s21, 0
      %p110 = por %p108, %p109
      %p111 = scmp.ne.s32.totalorder %s97, %s98
      %p112 = scmp.eq.s32.totalorder %s22, 1
      %p113 = por %p111, %p112
      %p115 = scmp.ne.s32.totalorder %s98, %s114
      %p116 = scmp.eq.s32.totalorder %s22, 0
      %p117 = por %p115, %p116
      %s118 = ssub.s32 %s23, %s35
      %s119 = ssub.s32 %s24, %s31
      %s120 = sor.u32 %s118, %s119
      %p121 = scmp.eq.s32.totalorder %s120, 0
      %s123 = sadd.s32 %s122, 1
      %s124 = scalar_select %p121, %s122, %s123
      %p127 = pneg %p121
      %p128 = scmp.eq.s32.totalorder %s16, 1
      %p129 = por %p127, %p128
      %p130 = scmp.ne.s32.totalorder %s122, %s125
      %p131 = scmp.eq.s32.totalorder %s16, 0
      %p132 = por %p130, %p131
      %p133 = scmp.ne.s32.totalorder %s122, %s125
      %p134 = scmp.eq.s32.totalorder %s21, 1
      %p135 = por %p133, %p134
      %p136 = scmp.ne.s32.totalorder %s125, %s126
      %p137 = scmp.eq.s32.totalorder %s21, 0
      %p138 = por %p136, %p137
      %p139 = scmp.ne.s32.totalorder %s125, %s126
      %p140 = scmp.eq.s32.totalorder %s22, 1
      %p141 = por %p139, %p140
      %p143 = scmp.ne.s32.totalorder %s126, %s142
      %p144 = scmp.eq.s32.totalorder %s22, 0
      %p145 = por %p143, %p144
      %p146 = scmp.le.s32.totalorder 1, %s16
      %p147 = scmp.lt.s32.totalorder %s16, 3
      %p148 = pnand %p146, %p147
      %p149 = pneg %p148
      // Predicated region
      $region9: #{tpu_custom_call.1} parent=5 // pred_check
        _
      $region10: #{tpu_custom_call.1} parent=5 // pred_check_branch
        %151 = sbr.rel (%p148) target = $region12
      $region11: #{tpu_custom_call.1} parent=5 // pred_region
        %s152 = ssub.s32 %s16, 1
      $region12: #{tpu_custom_call.1} parent=5 // pred_fallthru
        _
      %p153 = scmp.lt.s32.totalorder %s16, 2
      // Predicated region
      $region13: #{tpu_custom_call.1} parent=5 // pred_check
        %p154 = pneg %p153
      $region14: #{tpu_custom_call.1} parent=5 // pred_check_branch
        %156 = sbr.rel (%p154) target = $region16
      $region15: #{tpu_custom_call.1} parent=5 // pred_region
        // Predicated region
        $region17: #{tpu_custom_call.1} parent=15 // pred_check
          %p157 = pneg %p50
        $region18: #{tpu_custom_call.1} parent=15 // pred_check_branch
          %159 = sbr.rel (%p157) target = $region20
        $region19: #{tpu_custom_call.1} parent=15 // pred_region
          %p160 = scmp.lt.s32.totalorder %s23, 1
          %s161 = scalar_select %p160, %s23, 1
          %p162 = scmp.lt.s32.totalorder %s24, 0
          %s163 = scalar_select %p162, %s24, 0
          %s164 = smul.addr %s161, 4
          %s165 = sadd.s32 %s163, %s164
          %s166 = smul.addr %s165, 4
          %s167 = scalar_lea.vmem %s0, %s166
        $region20: #{tpu_custom_call.1} parent=15 // pred_fallthru
          _
        // Predicated region
        $region21: #{tpu_custom_call.1} parent=15 // pred_check
          %p168 = pneg %p76
        $region22: #{tpu_custom_call.1} parent=15 // pred_check_branch
          %170 = sbr.rel (%p168) target = $region24
        $region23: #{tpu_custom_call.1} parent=15 // pred_region
          %p171 = scmp.lt.s32.totalorder %s23, 1
          %s172 = scalar_select %p171, %s23, 1
          %s173 = smul.addr %s172, 4
          %s174 = smul.addr %s173, 4
          %s175 = scalar_lea.vmem %s1, %s174
        $region24: #{tpu_custom_call.1} parent=15 // pred_fallthru
          _
      $region16: #{tpu_custom_call.1} parent=5 // pred_fallthru
        _
      %p176 = scmp.le.s32.totalorder 1, %s16
      %p177 = scmp.lt.s32.totalorder %s16, 3
      %p178 = pnand %p176, %p177
      %p179 = pneg %p178
      // Predicated region
      $region25: #{tpu_custom_call.1} parent=5 // pred_check
        _
      $region26: #{tpu_custom_call.1} parent=5 // pred_check_branch
        %181 = sbr.rel (%p178) target = $region28
      $region27: #{tpu_custom_call.1} parent=5 // pred_region
        %s182 = ssub.s32 %s16, 1
        %p183 = scmp.lt.s32.totalorder %s25, 1
        %s184 = scalar_select %p183, %s25, 1
        %p185 = scmp.lt.s32.totalorder %s26, 0
        %s186 = scalar_select %p185, %s26, 0
        %s187 = smul.addr %s184, 4
        %s188 = sadd.s32 %s186, %s187
        %s189 = smul.addr %s188, 4
        %s190 = scalar_lea.vmem %s0, %s189
        %p191 = pneg %p56
        %p192 = pneg %p53
        %p193 = scmp.lt.s32.totalorder %s25, 1
        %s194 = scalar_select %p193, %s25, 1
        %s195 = smul.addr %s194, 4
        %s196 = smul.addr %s195, 4
        %s197 = scalar_lea.vmem %s1, %s196
        %p198 = pneg %p82
        %p199 = pneg %p79
        %p200 = pneg %p110
        %p201 = pneg %p107
        %s202 = sand.u32 %s97, 1
        %s203 = scalar_lea.sflag [#allocation3], %s202
        %s204 = sand.u32 %s97, 1
        %s205 = smul.addr %s204, 32
        %s206 = scalar_lea.vmem [#allocation2], %s205
        %p207 = pneg %p138
        %p208 = pneg %p135
        %s209 = sand.u32 %s125, 1
        %s210 = scalar_lea.sflag [#allocation5], %s209
        %s211 = sand.u32 %s125, 1
        %s212 = smul.addr %s211, 8
        %s213 = scalar_lea.vmem [#allocation4], %s212
        %p214 = scmp.lt.s32.totalorder %s25, 1
        %s215 = scalar_select %p214, %s25, 1
        %p216 = scmp.lt.s32.totalorder %s26, 0
        %s217 = scalar_select %p216, %s26, 0
        %s218 = smul.addr %s215, 4
        %s219 = sadd.s32 %s217, %s218
        %s220 = smul.addr %s219, 4
        %s221 = scalar_lea.vmem %s0, %s220
        %p222 = scmp.lt.s32.totalorder %s25, 1
        %s223 = scalar_select %p222, %s25, 1
        %s224 = smul.addr %s223, 4
        %s225 = smul.addr %s224, 4
        %s226 = scalar_lea.vmem %s1, %s225
        %v228 = vld [vmem:[%s221] sm:$0xf]
        %v229 = vld [vmem:[%s221 + $0x4] sm:$0xf]
        %v230 = vld [vmem:[%s221 + $0x8] sm:$0xf]
        %v231 = vld [vmem:[%s221 + $0xc] sm:$0xf]
        %v232 = vld [vmem:[%s226] sm:$0xf]
        %v233 = vld [vmem:[%s226 + $0x4] sm:$0xf]
        %v234 = vld [vmem:[%s226 + $0x8] sm:$0xf]
        %v235 = vld [vmem:[%s226 + $0xc] sm:$0xf]
        %v240 = vunpack.c.l.b16 %v232
        %v241 = vunpack.c.l.b16 %v233
        %v242 = vunpack.c.l.b16 %v234
        %v243 = vunpack.c.l.b16 %v235
        %v244 = vpack.c.b16 %v241, %v240
        %v245 = vpack.c.b16 %v243, %v242
        %248 = vxpose.xlu0.c.b16.start [1/8] %v244, 128
        %249 = vxpose.xlu0.c.b16.cont [2/8] %v245, 128
        %250 = vxpose.xlu0.c.b16.cont [3/8] 0, 128
        %251 = vxpose.xlu0.c.b16.cont [4/8] 0, 128
        %252 = vxpose.xlu0.c.b16.cont [5/8] 0, 128
        %253 = vxpose.xlu0.c.b16.cont [6/8] 0, 128
        %254 = vxpose.xlu0.c.b16.cont [7/8] 0, 128
        %255 = vxpose.xlu0.c.b16.end [8/8] 0, 128
        %v256 = vpop.trf.xlu0
        %v257 = vpop.trf.xlu0
        %v258 = vpop.trf.xlu0
        %v259 = vpop.trf.xlu0
        %v260 = vpop.trf.xlu0
        %v261 = vpop.trf.xlu0
        %v262 = vpop.trf.xlu0
        %v263 = vpop.trf.xlu0
        %v268 = vunpack.c.l.b16 %v228
        %v269 = vunpack.c.l.b16 %v229
        %v270 = vunpack.c.l.b16 %v230
        %v271 = vunpack.c.l.b16 %v231
        %v272 = vpack.c.b16 %v269, %v268
        %v273 = vpack.c.b16 %v271, %v270
        %vm276 = vcmask 261120
        %v278 = vsel %vm276, %v256, 0
        %280 = vmatprep.subr.bf16.mxu0 0
        %281 = vmatpush1.bf16.msra.mxu0 %v272
        %282 = vmatprep.subr.bf16.mxu0 0
        %283 = vmatpush1.bf16.msra.mxu0 %v273
        %284 = vmatprep.subr.bf16.mxu0 0
        %285 = vmatpush1.bf16.msra.mxu0 0
        %286 = vmatprep.subr.bf16.mxu0 0
        %287 = vmatpush1.bf16.msra.mxu0 0
        %288 = vmatprep.subr.bf16.mxu0 0
        %289 = vmatpush1.bf16.msra.mxu0 0
        %290 = vmatprep.subr.bf16.mxu0 0
        %291 = vmatpush1.bf16.msra.mxu0 0
        %292 = vmatprep.subr.bf16.mxu0 0
        %293 = vmatpush1.bf16.msra.mxu0 0
        %294 = vmatprep.subr.bf16.mxu0 0
        %295 = vmatpush1.bf16.msra.mxu0 0
        %296 = vmatprep.subr.bf16.mxu0 0
        %297 = vmatpush1.bf16.msra.mxu0 0
        %298 = vmatprep.subr.bf16.mxu0 0
        %299 = vmatpush1.bf16.msra.mxu0 0
        %300 = vmatprep.subr.bf16.mxu0 0
        %301 = vmatpush1.bf16.msra.mxu0 0
        %302 = vmatprep.subr.bf16.mxu0 0
        %303 = vmatpush1.bf16.msra.mxu0 0
        %304 = vmatprep.subr.bf16.mxu0 0
        %305 = vmatpush1.bf16.msra.mxu0 0
        %306 = vmatprep.subr.bf16.mxu0 0
        %307 = vmatpush1.bf16.msra.mxu0 0
        %308 = vmatprep.subr.bf16.mxu0 0
        %309 = vmatpush1.bf16.msra.mxu0 0
        %310 = vmatprep.subr.bf16.mxu0 0
        %311 = vmatpush1.bf16.msra.mxu0 0
        %312 = vmatprep.mubr.bf16.mxu0 0
        %313 = vmatmul.mubr.bf16.gmra.mrb[0].mxu0 %v278
        %v314 = vpop.f32.mrb[0].mxu0
        %v315 = vadd.f32 0.0, %v314
        %v316 = vpop.f32.mrb[0].mxu0
        %v317 = vpop.f32.mrb[0].mxu0
        %v318 = vpop.f32.mrb[0].mxu0
        %319 = vdwg.mxu0
        %v320 = vrot.slane %v315, 4
        %v321 = vmax.f32 %v315, %v320
        %v322 = vrot.slane %v321, 2
        %v323 = vmax.f32 %v321, %v322
        %v324 = vrot.slane %v323, 1
        %v325 = vmax.f32 %v323, %v324
        %v326 = vsub.f32 %v315, %v325
        %v327 = vmul.f32 %v326, 1.442695
        %v328 = vpow.pop %v327
        %v329 = vrot.slane %v328, 4
        %v330 = vadd.f32 %v328, %v329
        %v331 = vrot.slane %v330, 2
        %v332 = vadd.f32 %v330, %v331
        %v333 = vrot.slane %v332, 1
        %v334 = vadd.f32 %v332, %v333
        %v335 = vrcp.pop %v334
        %v336 = vmul.f32 %v328, %v335
        %v337 = vpack.c.bf16 %v336, %v336
        %vm338 = vcmask 64512
        %v340 = vsel %vm338, %v244, 0
        %v343 = vsel %vm338, %v245, 0
        %vm345 = vcmask 1043456
        %v347 = vsel %vm345, %v337, 0
        %349 = vmatprep.subr.bf16.mxu0 0
        %350 = vmatpush1.bf16.msra.mxu0 %v347
        %351 = vmatprep.subr.bf16.mxu0 0
        %352 = vmatpush1.bf16.msra.mxu0 0
        %353 = vmatprep.subr.bf16.mxu0 0
        %354 = vmatpush1.bf16.msra.mxu0 0
        %355 = vmatprep.subr.bf16.mxu0 0
        %356 = vmatpush1.bf16.msra.mxu0 0
        %357 = vmatprep.subr.bf16.mxu0 0
        %358 = vmatpush1.bf16.msra.mxu0 0
        %359 = vmatprep.subr.bf16.mxu0 0
        %360 = vmatpush1.bf16.msra.mxu0 0
        %361 = vmatprep.subr.bf16.mxu0 0
        %362 = vmatpush1.bf16.msra.mxu0 0
        %363 = vmatprep.subr.bf16.mxu0 0
        %364 = vmatpush1.bf16.msra.mxu0 0
        %365 = vmatprep.subr.bf16.mxu0 0
        %366 = vmatpush1.bf16.msra.mxu0 0
        %367 = vmatprep.subr.bf16.mxu0 0
        %368 = vmatpush1.bf16.msra.mxu0 0
        %369 = vmatprep.subr.bf16.mxu0 0
        %370 = vmatpush1.bf16.msra.mxu0 0
        %371 = vmatprep.subr.bf16.mxu0 0
        %372 = vmatpush1.bf16.msra.mxu0 0
        %373 = vmatprep.subr.bf16.mxu0 0
        %374 = vmatpush1.bf16.msra.mxu0 0
        %375 = vmatprep.subr.bf16.mxu0 0
        %376 = vmatpush1.bf16.msra.mxu0 0
        %377 = vmatprep.subr.bf16.mxu0 0
        %378 = vmatpush1.bf16.msra.mxu0 0
        %379 = vmatprep.subr.bf16.mxu0 0
        %380 = vmatpush1.bf16.msra.mxu0 0
        %381 = vmatprep.mubr.bf16.mxu0 0
        %382 = vmatmul.mubr.bf16.gmra.mrb[0].mxu0 %v340
        %v383 = vpop.f32.mrb[0].mxu0
        %v384 = vadd.f32 0.0, %v383
        %v385 = vpop.f32.mrb[0].mxu0
        %v386 = vpop.f32.mrb[0].mxu0
        %v387 = vadd.f32 0.0, %v386
        %v388 = vpop.f32.mrb[0].mxu0
        %389 = vmatprep.mubr.bf16.mxu0 0
        %390 = vmatmul.mubr.bf16.gmra.mrb[0].mxu0 %v343
        %v391 = vpop.f32.mrb[0].mxu0
        %v392 = vadd.f32 0.0, %v391
        %v393 = vpop.f32.mrb[0].mxu0
        %v394 = vpop.f32.mrb[0].mxu0
        %v395 = vadd.f32 0.0, %v394
        %v396 = vpop.f32.mrb[0].mxu0
        %397 = vdwg.mxu0
        %398 = vst [vmem:[%s206] sm:$0xff] %v384
        %399 = vst [vmem:[%s206 + $0x8] sm:$0xff] %v387
        %400 = vst [vmem:[%s206 + $0x10] sm:$0xff] %v392
        %401 = vst [vmem:[%s206 + $0x18] sm:$0xff] %v395
        %402 = vst [vmem:[%s213] sm:$0xff] %v336
        %s403 = sand.u32 %s97, 1
        %s404 = scalar_lea.sflag [#allocation3], %s403
        %s405 = sand.u32 %s97, 1
        %s406 = smul.addr %s405, 32
        %s407 = scalar_lea.vmem [#allocation2], %s406
        %s408 = sand.u32 %s125, 1
        %s409 = scalar_lea.sflag [#allocation5], %s408
        %s410 = sand.u32 %s125, 1
        %s411 = smul.addr %s410, 8
        %s412 = scalar_lea.vmem [#allocation4], %s411
        // Predicated region
        $region29: #{tpu_custom_call.1} parent=27 // pred_check
          %p413 = pneg %p107
        $region30: #{tpu_custom_call.1} parent=27 // pred_check_branch
          %415 = sbr.rel (%p413) target = $region32
        $region31: #{tpu_custom_call.1} parent=27 // pred_region
          %s417 = ssub.s32 512, 512
          %418 = vsyncadd %s404, %s417
          %s419 = smul.addr %s25, 4
          %s420 = sadd.s32 %s26, %s419
          %s421 = smul.addr %s420, 128
          %s422 = scalar_lea.hbm %s2, %s421
          %s423 = sshll.u32 %s407, 4
          %s424 = int_to_ptr.vmem [resolvable:$true] %s423
          %429 = dma.vmem_to_hbm [thread:$0]  %s424, 512, %s422, %s404, 128, 128, 8
        $region32: #{tpu_custom_call.1} parent=27 // pred_fallthru
          _
        // Predicated region
        $region33: #{tpu_custom_call.1} parent=27 // pred_check
          %p430 = pneg %p135
        $region34: #{tpu_custom_call.1} parent=27 // pred_check_branch
          %432 = sbr.rel (%p430) target = $region36
        $region35: #{tpu_custom_call.1} parent=27 // pred_region
          %s434 = ssub.s32 128, 128
          %435 = vsyncadd %s409, %s434
          %s436 = sadd.s32 %s26, %s25
          %s437 = smul.addr %s436, 128
          %s438 = scalar_lea.hbm %s3, %s437
          %s440 = sshll.u32 %s412, 4
          %s441 = int_to_ptr.vmem [resolvable:$true] %s440
          %443 = dma.vmem_to_hbm [thread:$0]  %s441, 128, %s438, %s409
        $region36: #{tpu_custom_call.1} parent=27 // pred_fallthru
          _
      $region28: #{tpu_custom_call.1} parent=5 // pred_fallthru
        _
      %p444 = scmp.le.s32.totalorder 2, %s16
      // Predicated region
      $region37: #{tpu_custom_call.1} parent=5 // pred_check
        %p445 = pneg %p444
      $region38: #{tpu_custom_call.1} parent=5 // pred_check_branch
        %447 = sbr.rel (%p445) target = $region40
      $region39: #{tpu_custom_call.1} parent=5 // pred_region
        %s448 = ssub.s32 %s16, 2
        // Predicated region
        $region41: #{tpu_custom_call.1} parent=39 // pred_check
          %p449 = pneg %p113
        $region42: #{tpu_custom_call.1} parent=39 // pred_check_branch
          %451 = sbr.rel (%p449) target = $region44
        $region43: #{tpu_custom_call.1} parent=39 // pred_region
          %s452 = sand.u32 %s98, 1
          %s453 = scalar_lea.sflag [#allocation3], %s452
          %s454 = sand.u32 %s98, 1
          %s455 = smul.addr %s454, 32
          %s456 = scalar_lea.vmem [#allocation2], %s455
          %457 = dma.done %s453, 512
        $region44: #{tpu_custom_call.1} parent=39 // pred_fallthru
          _
        // Predicated region
        $region45: #{tpu_custom_call.1} parent=39 // pred_check
          %p458 = pneg %p141
        $region46: #{tpu_custom_call.1} parent=39 // pred_check_branch
          %460 = sbr.rel (%p458) target = $region48
        $region47: #{tpu_custom_call.1} parent=39 // pred_region
          %s461 = sand.u32 %s126, 1
          %s462 = scalar_lea.sflag [#allocation5], %s461
          %s463 = sand.u32 %s126, 1
          %s464 = smul.addr %s463, 8
          %s465 = scalar_lea.vmem [#allocation4], %s464
          %466 = dma.done %s462, 128
        $region48: #{tpu_custom_call.1} parent=39 // pred_fallthru
          _
      $region40: #{tpu_custom_call.1} parent=5 // pred_fallthru
        _
    $region6: #{tpu_custom_call.1} parent=1 // loop_footer
      %s20 = sadd.s32 1, %s16
    $region7: #{tpu_custom_call.1} parent=1 // loop_footer_branch
      %15 = sbr.rel target = $region3
    $region8: #{tpu_custom_call.1} parent=1 // loop_exit
      _
    %467 = vsyncpa [#allocation3], 1
    %s468 = scalar_lea.sflag [#allocation3], 1
    %469 = vsyncpa %s468, 1
    %470 = vsyncpa [#allocation5], 1
    %s471 = scalar_lea.sflag [#allocation5], 1
    %472 = vsyncpa %s471, 1

</llo_original>
